<compile_context>
chip_gen: v7x
topology: tpu7x:2x2x1
jax: 0.10.0
libtpu: 0.0.40
codegen_flags: <defaults>
</compile_context>

<pallas_src>
import math

import jax
import jax.numpy as jnp
from jax import lax
from jax.experimental import pallas as pl
from jax.experimental.pallas import tpu as pltpu

HIDDEN = 256
SUBLANE = 8        # pad action_dim (output rows) up to a sublane multiple
MAX_TILE_B = 1024  # upper bound on the batch tile (rows)


def _round_up(n, m):
    return ((n + m - 1) // m) * m


def _pick_tile_b(batch):
    """Batch tile: big enough to amortize per-grid-step overhead, but capped so
    large batches produce >= 2 independent tiles (feeds both v7x TensorCores)."""
    p = _round_up(batch, 128)
    if p <= 512:
        return p
    half = _round_up((p + 1) // 2, 128)
    return min(MAX_TILE_B, half)


def actor_kernel(x_ref, w1_ref, b1_ref, w2_ref, b2_ref, w3t_ref, b3t_ref, o_ref):
    # fc1 + relu: bf16 MXU operands, f32 accumulation, f32 epilogue.
    h1 = jnp.dot(x_ref[...], w1_ref[...], preferred_element_type=jnp.float32)
    h1 = jnp.maximum(h1 + b1_ref[...], 0.0)
    # fc2 + relu.
    h2 = jnp.dot(h1.astype(jnp.bfloat16), w2_ref[...],
                 preferred_element_type=jnp.float32)
    h2 = jnp.maximum(h2 + b2_ref[...], 0.0)
    # fc3, produced transposed on the MXU: y_t[a, b] = sum_k w3t[a, k] * h2[b, k].
    # Output block is (8, tile_b): lane-dense along the batch, only ~action_dim
    # rows of f32 writeback instead of a 128-column padded slab.
    y_t = lax.dot_general(w3t_ref[...], h2.astype(jnp.bfloat16),
                          dimension_numbers=(((1,), (1,)), ((), ())),
                          preferred_element_type=jnp.float32)
    y_t = y_t + b3t_ref[...]
    # tanh rides the EUP slot; the -0.9 shift is VPU work — both effectively free.
    o_ref[...] = jnp.tanh(y_t) - 0.9


def prepare_actor_params(params):
    """One-time parameter prep (run once per weight update, NOT per forward call):
    bf16 casts for the MXU plus a sublane-padded, pre-transposed fc3."""
    w1, b1, w2, b2, w3, b3 = params
    hidden, action_dim = w3.shape
    pad_a = _round_up(action_dim, SUBLANE)
    w3t = jnp.zeros((pad_a, hidden), jnp.float32).at[:action_dim, :].set(w3.T)
    b3t = jnp.zeros((pad_a, 1), jnp.float32).at[:action_dim, 0].set(b3.reshape(-1))
    return {
        "w1": w1.astype(jnp.bfloat16),
        "b1": b1,                        # (1, 256) f32
        "w2": w2.astype(jnp.bfloat16),
        "b2": b2,                        # (1, 256) f32
        "w3t": w3t.astype(jnp.bfloat16),  # (pad_a, 256) bf16
        "b3t": b3t,                       # (pad_a, 1) f32
        "action_dim": int(action_dim),
        "pad_a": int(pad_a),
    }


def actor_forward(x, prep):
    """x: (batch, state_dim) f32. prep: output of prepare_actor_params."""
    batch, state_dim = x.shape
    action_dim = prep["action_dim"]
    pad_a = prep["pad_a"]

    tile_b = _pick_tile_b(batch)
    padded_b = _round_up(batch, tile_b)

    xb = x.astype(jnp.bfloat16)
    if padded_b != batch:
        xb = jnp.zeros((padded_b, state_dim), jnp.bfloat16).at[:batch].set(xb)
    # TODO(synk): for tiny batches (<~128) a plain-XLA fallback would skip the
    # pad + kernel-launch overhead entirely; kept on the kernel path here.

    out_t = pl.pallas_call(
        actor_kernel,
        out_shape=jax.ShapeDtypeStruct((pad_a, padded_b), jnp.float32),
        grid_spec=pltpu.PrefetchScalarGridSpec(
            num_scalar_prefetch=0,
            grid=(padded_b // tile_b,),
            in_specs=[
                pl.BlockSpec((tile_b, state_dim), lambda i: (i, 0)),   # x tile (streams)
                pl.BlockSpec((state_dim, HIDDEN), lambda i: (0, 0)),   # w1 (resident)
                pl.BlockSpec((1, HIDDEN), lambda i: (0, 0)),           # b1 (resident)
                pl.BlockSpec((HIDDEN, HIDDEN), lambda i: (0, 0)),      # w2 (resident)
                pl.BlockSpec((1, HIDDEN), lambda i: (0, 0)),           # b2 (resident)
                pl.BlockSpec((pad_a, HIDDEN), lambda i: (0, 0)),       # w3^T padded (resident)
                pl.BlockSpec((pad_a, 1), lambda i: (0, 0)),            # b3^T padded (resident)
            ],
            out_specs=pl.BlockSpec((pad_a, tile_b), lambda i: (0, i)),
        ),
        compiler_params=pltpu.CompilerParams(
            # batch tiles are independent -> shard across v7x's two TensorCores
            dimension_semantics=("parallel",)),
    )(xb, prep["w1"], prep["b1"], prep["w2"], prep["b2"], prep["w3t"], prep["b3t"])

    return out_t[:action_dim, :batch].T


def init_linear(key, fan_in, fan_out):
    """Deterministic init matching PyTorch nn.Linear default (uniform +/- 1/sqrt(fan_in))."""
    kw, kb = jax.random.split(key)
    bound = 1.0 / math.sqrt(fan_in)
    w = jax.random.uniform(kw, (fan_in, fan_out), jnp.float32, -bound, bound)
    b = jax.random.uniform(kb, (1, fan_out), jnp.float32, -bound, bound)
    return w, b


def make_actor_params(key, state_dim, action_dim, hidden=HIDDEN):
    k1, k2, k3 = jax.random.split(key, 3)
    w1, b1 = init_linear(k1, state_dim, hidden)
    w2, b2 = init_linear(k2, hidden, hidden)
    w3, b3 = init_linear(k3, hidden, action_dim)
    return (w1, b1, w2, b2, w3, b3)


def reference_forward_f32(x, params):
    """Full-f32 reference (matches the PyTorch module exactly)."""
    w1, b1, w2, b2, w3, b3 = params
    h1 = jnp.maximum(x @ w1 + b1, 0.0)
    h2 = jnp.maximum(h1 @ w2 + b2, 0.0)
    return jnp.tanh(h2 @ w3 + b3) - 0.9


def reference_forward_mixed(x, params):
    """Reference mirroring the kernel's bf16-operand / f32-accumulate matmuls."""
    w1, b1, w2, b2, w3, b3 = params
    bf = jnp.bfloat16
    h1 = jnp.dot(x.astype(bf), w1.astype(bf), preferred_element_type=jnp.float32) + b1
    h1 = jnp.maximum(h1, 0.0)
    h2 = jnp.dot(h1.astype(bf), w2.astype(bf), preferred_element_type=jnp.float32) + b2
    h2 = jnp.maximum(h2, 0.0)
    y = jnp.dot(h2.astype(bf), w3.astype(bf), preferred_element_type=jnp.float32) + b3
    return jnp.tanh(y) - 0.9


if __name__ == "__main__":
    key = jax.random.PRNGKey(0)
    k_params, k_x, k_x2 = jax.random.split(key, 3)

    batch, state_dim, action_dim = 2, 8, 4
    params = make_actor_params(k_params, state_dim, action_dim)
    prep = prepare_actor_params(params)   # one-time weight prep (hoisted)

    # Small-batch path (single 128-row tile, padded batch).
    x = jax.random.normal(k_x, (batch, state_dim), jnp.float32)
    out = jax.block_until_ready(actor_forward(x, prep))
    assert out.shape == (batch, action_dim)

    # Tight check against a reference with the same bf16/f32 mixed precision.
    ref_mixed = reference_forward_mixed(x, params)
    assert jnp.allclose(out, ref_mixed, atol=2e-3, rtol=2e-3), (out, ref_mixed)

    # Loose check against the exact f32 PyTorch-equivalent math (bf16 operand
    # rounding only; f32 accumulation + bounded tanh keep the error tiny).
    ref_f32 = reference_forward_f32(x, params)
    assert jnp.allclose(out, ref_f32, atol=5e-2, rtol=5e-2), (out, ref_f32)

    # Multi-tile path: big enough batch for >= 2 grid steps plus batch padding.
    big_batch = 1100
    xb = jax.random.normal(k_x2, (big_batch, state_dim), jnp.float32)
    out_big = jax.block_until_ready(actor_forward(xb, prep))
    assert out_big.shape == (big_batch, action_dim)
    ref_big = reference_forward_mixed(xb, params)
    assert jnp.allclose(out_big, ref_big, atol=2e-3, rtol=2e-3)

    print("KERNEL_OK")
</pallas_src>

<mosaic_0001>
module attributes {stable_mosaic.version = 11 : i64} {
  func.func @actor_kernel(%arg0: i32, %arg1: memref<128x8xbf16, #tpu.memory_space<vmem>>, %arg2: memref<8x256xbf16, #tpu.memory_space<vmem>>, %arg3: memref<1x256xf32, #tpu.memory_space<vmem>>, %arg4: memref<256x256xbf16, #tpu.memory_space<vmem>>, %arg5: memref<1x256xf32, #tpu.memory_space<vmem>>, %arg6: memref<8x256xbf16, #tpu.memory_space<vmem>>, %arg7: memref<8x1xf32, #tpu.memory_space<vmem>>, %arg8: memref<8x128xf32, #tpu.memory_space<vmem>>) attributes {dimension_semantics = [#tpu.dimension_semantics<parallel>], iteration_bounds = array<i64: 1>, scalar_prefetch = 0 : i64, scratch_operands = 0 : i64, tpu.core_type = #tpu.core_type<tc>, window_params = [{transform_indices = @transform_0, window_bounds = array<i64: 128, 8>}, {pipeline_mode = #tpu.pipeline_mode<synchronous>, transform_indices = @transform_1, window_bounds = array<i64: 8, 256>}, {pipeline_mode = #tpu.pipeline_mode<synchronous>, transform_indices = @transform_2, window_bounds = array<i64: 1, 256>}, {pipeline_mode = #tpu.pipeline_mode<synchronous>, transform_indices = @transform_3, window_bounds = array<i64: 256, 256>}, {pipeline_mode = #tpu.pipeline_mode<synchronous>, transform_indices = @transform_4, window_bounds = array<i64: 1, 256>}, {pipeline_mode = #tpu.pipeline_mode<synchronous>, transform_indices = @transform_5, window_bounds = array<i64: 8, 256>}, {pipeline_mode = #tpu.pipeline_mode<synchronous>, transform_indices = @transform_6, window_bounds = array<i64: 8, 1>}, {transform_indices = @transform_7, window_bounds = array<i64: 8, 128>}]} {
    %c0 = arith.constant 0 : index
    %c0_0 = arith.constant 0 : index
    %0 = vector.load %arg1[%c0, %c0_0] : memref<128x8xbf16, #tpu.memory_space<vmem>>, vector<128x8xbf16>
    %c0_1 = arith.constant 0 : index
    %c0_2 = arith.constant 0 : index
    %1 = vector.load %arg2[%c0_1, %c0_2] : memref<8x256xbf16, #tpu.memory_space<vmem>>, vector<8x256xbf16>
    %cst = arith.constant dense<0.000000e+00> : vector<128x256xf32>
    %2 = tpu.matmul %0, %1, %cst {dimension_numbers = #tpu.dot_dimension_numbers<[1], [0], [0], [1], [0, 0, 1, 1], [], []>} : vector<128x8xbf16>, vector<8x256xbf16>, vector<128x256xf32> -> vector<128x256xf32>
    %c0_3 = arith.constant 0 : index
    %c0_4 = arith.constant 0 : index
    %3 = vector.load %arg3[%c0_3, %c0_4] : memref<1x256xf32, #tpu.memory_space<vmem>>, vector<1x256xf32>
    %4 = vector.broadcast %3 : vector<1x256xf32> to vector<128x256xf32>
    %5 = arith.addf %2, %4 : vector<128x256xf32>
    %cst_5 = arith.constant 0.000000e+00 : f32
    %6 = vector.broadcast %cst_5 : f32 to vector<128x256xf32>
    %7 = arith.maximumf %5, %6 : vector<128x256xf32>
    %8 = arith.truncf %7 : vector<128x256xf32> to vector<128x256xbf16>
    %c0_6 = arith.constant 0 : index
    %c0_7 = arith.constant 0 : index
    %9 = vector.load %arg4[%c0_6, %c0_7] : memref<256x256xbf16, #tpu.memory_space<vmem>>, vector<256x256xbf16>
    %cst_8 = arith.constant dense<0.000000e+00> : vector<128x256xf32>
    %10 = tpu.matmul %8, %9, %cst_8 {dimension_numbers = #tpu.dot_dimension_numbers<[1], [0], [0], [1], [0, 0, 1, 1], [], []>} : vector<128x256xbf16>, vector<256x256xbf16>, vector<128x256xf32> -> vector<128x256xf32>
    %c0_9 = arith.constant 0 : index
    %c0_10 = arith.constant 0 : index
    %11 = vector.load %arg5[%c0_9, %c0_10] : memref<1x256xf32, #tpu.memory_space<vmem>>, vector<1x256xf32>
    %12 = vector.broadcast %11 : vector<1x256xf32> to vector<128x256xf32>
    %13 = arith.addf %10, %12 : vector<128x256xf32>
    %cst_11 = arith.constant 0.000000e+00 : f32
    %14 = vector.broadcast %cst_11 : f32 to vector<128x256xf32>
    %15 = arith.maximumf %13, %14 : vector<128x256xf32>
    %c0_12 = arith.constant 0 : index
    %c0_13 = arith.constant 0 : index
    %16 = vector.load %arg6[%c0_12, %c0_13] : memref<8x256xbf16, #tpu.memory_space<vmem>>, vector<8x256xbf16>
    %17 = arith.truncf %15 : vector<128x256xf32> to vector<128x256xbf16>
    %cst_14 = arith.constant dense<0.000000e+00> : vector<8x128xf32>
    %18 = tpu.matmul %16, %17, %cst_14 {dimension_numbers = #tpu.dot_dimension_numbers<[1], [1], [0], [0], [0, 0, 1, 0], [], []>} : vector<8x256xbf16>, vector<128x256xbf16>, vector<8x128xf32> -> vector<8x128xf32>
    %c0_15 = arith.constant 0 : index
    %c0_16 = arith.constant 0 : index
    %19 = vector.load %arg7[%c0_15, %c0_16] : memref<8x1xf32, #tpu.memory_space<vmem>>, vector<8x1xf32>
    %20 = vector.broadcast %19 : vector<8x1xf32> to vector<8x128xf32>
    %21 = arith.addf %18, %20 : vector<8x128xf32>
    %22 = math.tanh %21 : vector<8x128xf32>
    %cst_17 = arith.constant 0.899999976 : f32
    %23 = vector.broadcast %cst_17 : f32 to vector<8x128xf32>
    %24 = arith.subf %22, %23 : vector<8x128xf32>
    %c0_18 = arith.constant 0 : index
    %c0_19 = arith.constant 0 : index
    %25 = vector.load %arg8[%c0_18, %c0_19] : memref<8x128xf32, #tpu.memory_space<vmem>>, vector<8x128xf32>
    tpu.vector_store %arg8[%c0_18, %c0_19], %24 {strides = array<i32>} : memref<8x128xf32, #tpu.memory_space<vmem>>, vector<8x128xf32>,
    return
  }
  func.func @transform_0(%arg0: i32) -> (i32, i32) {
    %c0_i32 = arith.constant 0 : i32
    %c0_i32_0 = arith.constant 0 : i32
    return %arg0, %c0_i32 : i32, i32
  }
  func.func @transform_1(%arg0: i32) -> (i32, i32) {
    %c0_i32 = arith.constant 0 : i32
    %c0_i32_0 = arith.constant 0 : i32
    %c0_i32_1 = arith.constant 0 : i32
    return %c0_i32, %c0_i32_0 : i32, i32
  }
  func.func @transform_2(%arg0: i32) -> (i32, i32) {
    %c0_i32 = arith.constant 0 : i32
    %c0_i32_0 = arith.constant 0 : i32
    %c0_i32_1 = arith.constant 0 : i32
    return %c0_i32, %c0_i32_0 : i32, i32
  }
  func.func @transform_3(%arg0: i32) -> (i32, i32) {
    %c0_i32 = arith.constant 0 : i32
    %c0_i32_0 = arith.constant 0 : i32
    %c0_i32_1 = arith.constant 0 : i32
    return %c0_i32, %c0_i32_0 : i32, i32
  }
  func.func @transform_4(%arg0: i32) -> (i32, i32) {
    %c0_i32 = arith.constant 0 : i32
    %c0_i32_0 = arith.constant 0 : i32
    %c0_i32_1 = arith.constant 0 : i32
    return %c0_i32, %c0_i32_0 : i32, i32
  }
  func.func @transform_5(%arg0: i32) -> (i32, i32) {
    %c0_i32 = arith.constant 0 : i32
    %c0_i32_0 = arith.constant 0 : i32
    %c0_i32_1 = arith.constant 0 : i32
    return %c0_i32, %c0_i32_0 : i32, i32
  }
  func.func @transform_6(%arg0: i32) -> (i32, i32) {
    %c0_i32 = arith.constant 0 : i32
    %c0_i32_0 = arith.constant 0 : i32
    %c0_i32_1 = arith.constant 0 : i32
    return %c0_i32, %c0_i32_0 : i32, i32
  }
  func.func @transform_7(%arg0: i32) -> (i32, i32) {
    %c0_i32 = arith.constant 0 : i32
    %c0_i32_0 = arith.constant 0 : i32
    return %c0_i32, %arg0 : i32, i32
  }
}

</mosaic_0001>

<llo_original>
// kernel: tpu_custom_call.1
$region0: #{tpu_custom_call.1}
  #allocation0 [shape = 'u32[]', space=smem, size = 0x4, offset = 0x4, fixed_abs, tag = 'smem constant byte address 0x4 - core index']
  #allocation1 [shape = 'u32[144,128]{1,0:T(1,128)}', space=vmem, size = 0x12000, scoped, tag = 'internal scratch']
  %s0 = inlined_call_operand.vmem [shape: bf16[128,8], index: 0, kind: input, shape index: {}]
  %s1 = inlined_call_operand.vmem [shape: bf16[8,256], index: 1, kind: input, shape index: {}]
  %s2 = inlined_call_operand.vmem [shape: f32[1,256], index: 2, kind: input, shape index: {}]
  %s3 = inlined_call_operand.hbm [shape: bf16[256,256], index: 3, kind: input, shape index: {}]
  %s4 = inlined_call_operand.vmem [shape: f32[1,256], index: 4, kind: input, shape index: {}]
  %s5 = inlined_call_operand.vmem [shape: bf16[8,256], index: 5, kind: input, shape index: {}]
  %s6 = inlined_call_operand.vmem [shape: f32[8,1], index: 6, kind: input, shape index: {}]
  %s7 = inlined_call_operand.hbm [shape: f32[8,128], index: 7, kind: output, shape index: {}]
  %s8 = sld [smem:[#allocation0]]
  $region42: #{tpu_custom_call.1} parent=0
    _
  %s10 = ssub.s32 1, %s8
  %s11 = scalar_select 0, %s10, %s8
  $region1: #{tpu_custom_call.1} parent=0
    #allocation2 [shape = 'u8[131072]{0}', space=vmem, size = 0x20000, scoped, tag = 'input window, operand 3, single buffered']
    #allocation3 [shape = 's32[1]{0}', space=sflag, size = 0x4, scoped, tag = 'scoped memory for tpu_custom_call.1']
    #allocation4 [shape = 's32[1]{0}', space=sflag, size = 0x4, scoped, tag = 'scoped memory for tpu_custom_call.1']
    #allocation5 [shape = 'u8[4096]{0}', space=vmem, size = 0x1000, scoped, tag = 'output window, operand 0, single buffered']
    %12 = vsyncpa [#allocation3], 0
    %13 = vsyncpa [#allocation4], 0
    // Predicated region
    $region2: #{tpu_custom_call.1} parent=1 // pred_check
      _
    $region3: #{tpu_custom_call.1} parent=1 // pred_check_branch
      %15 = sbr.rel (0) target = $region5
    $region4: #{tpu_custom_call.1} parent=1 // pred_region
      _
    $region5: #{tpu_custom_call.1} parent=1 // pred_fallthru
      _
    // Predicated region
    $region6: #{tpu_custom_call.1} parent=1 // pred_check
      _
    $region7: #{tpu_custom_call.1} parent=1 // pred_check_branch
      %17 = sbr.rel (0) target = $region9
    $region8: #{tpu_custom_call.1} parent=1 // pred_region
      _
    $region9: #{tpu_custom_call.1} parent=1 // pred_fallthru
      _
    // Predicated region
    $region10: #{tpu_custom_call.1} parent=1 // pred_check
      _
    $region11: #{tpu_custom_call.1} parent=1 // pred_check_branch
      %19 = sbr.rel (0) target = $region13
    $region12: #{tpu_custom_call.1} parent=1 // pred_region
      _
    $region13: #{tpu_custom_call.1} parent=1 // pred_fallthru
      _
    // Predicated region
    $region14: #{tpu_custom_call.1} parent=1 // pred_check
      _
    $region15: #{tpu_custom_call.1} parent=1 // pred_check_branch
      %21 = sbr.rel (0) target = $region17
    $region16: #{tpu_custom_call.1} parent=1 // pred_region
      %s23 = ssub.s32 4096, 4096
      %24 = vsyncadd [#allocation3], %s23
      %s25 = sshll.u32 [#allocation2], 4
      %s26 = int_to_ptr.vmem [resolvable:$true] %s25
      %31 = dma.hbm_to_vmem [thread:$0]  %s3, 4096, %s26, [#allocation3], 128, 128, 8
    $region17: #{tpu_custom_call.1} parent=1 // pred_fallthru
      _
    // Predicated region
    $region18: #{tpu_custom_call.1} parent=1 // pred_check
      _
    $region19: #{tpu_custom_call.1} parent=1 // pred_check_branch
      %33 = sbr.rel (0) target = $region21
    $region20: #{tpu_custom_call.1} parent=1 // pred_region
      _
    $region21: #{tpu_custom_call.1} parent=1 // pred_fallthru
      _
    // Predicated region
    $region22: #{tpu_custom_call.1} parent=1 // pred_check
      _
    $region23: #{tpu_custom_call.1} parent=1 // pred_check_branch
      %35 = sbr.rel (0) target = $region25
    $region24: #{tpu_custom_call.1} parent=1 // pred_region
      _
    $region25: #{tpu_custom_call.1} parent=1 // pred_fallthru
      _
    // Predicated region
    $region26: #{tpu_custom_call.1} parent=1 // pred_check
      _
    $region27: #{tpu_custom_call.1} parent=1 // pred_check_branch
      %37 = sbr.rel (0) target = $region29
    $region28: #{tpu_custom_call.1} parent=1 // pred_region
      _
    $region29: #{tpu_custom_call.1} parent=1 // pred_fallthru
      _
    // Predicated region
    $region30: #{tpu_custom_call.1} parent=1 // pred_check
      _
    $region31: #{tpu_custom_call.1} parent=1 // pred_check_branch
      %39 = sbr.rel (0) target = $region33
    $region32: #{tpu_custom_call.1} parent=1 // pred_region
      %40 = dma.done [#allocation3], 4096
    $region33: #{tpu_custom_call.1} parent=1 // pred_fallthru
      _
    %v42 = vld [vmem:[%s0] sm:$0xf]
    %v43 = vld [vmem:[%s0 + $0x4] sm:$0xf]
    %v44 = vld [vmem:[%s0 + $0x8] sm:$0xf]
    %v45 = vld [vmem:[%s0 + $0xc] sm:$0xf]
    %v46 = vld [vmem:[%s0 + $0x10] sm:$0xf]
    %v47 = vld [vmem:[%s0 + $0x14] sm:$0xf]
    %v48 = vld [vmem:[%s0 + $0x18] sm:$0xf]
    %v49 = vld [vmem:[%s0 + $0x1c] sm:$0xf]
    %v50 = vld [vmem:[%s0 + $0x20] sm:$0xf]
    %v51 = vld [vmem:[%s0 + $0x24] sm:$0xf]
    %v52 = vld [vmem:[%s0 + $0x28] sm:$0xf]
    %v53 = vld [vmem:[%s0 + $0x2c] sm:$0xf]
    %v54 = vld [vmem:[%s0 + $0x30] sm:$0xf]
    %v55 = vld [vmem:[%s0 + $0x34] sm:$0xf]
    %v56 = vld [vmem:[%s0 + $0x38] sm:$0xf]
    %v57 = vld [vmem:[%s0 + $0x3c] sm:$0xf]
    %v58 = vld [vmem:[%s1] sm:$0xff]
    %v59 = vld [vmem:[%s2] sm:$0x3]
    %v61 = vlaneseq
    %v62 = vshrl.u32 %v61, 7
    %v63 = vsub.s32 0, %v62
    %v64 = vrot.slane %v59, %v63
    %v65 = vlaneseq
    %v66 = vshrl.u32 %v65, 7
    %v67 = vsub.s32 1, %v66
    %v68 = vrot.slane %v59, %v67
    %v87 = vunpack.c.l.b16 %v42
    %v88 = vunpack.c.l.b16 %v43
    %v89 = vunpack.c.l.b16 %v44
    %v90 = vunpack.c.l.b16 %v45
    %v91 = vunpack.c.l.b16 %v46
    %v92 = vunpack.c.l.b16 %v47
    %v93 = vunpack.c.l.b16 %v48
    %v94 = vunpack.c.l.b16 %v49
    %v95 = vunpack.c.l.b16 %v50
    %v96 = vunpack.c.l.b16 %v51
    %v97 = vunpack.c.l.b16 %v52
    %v98 = vunpack.c.l.b16 %v53
    %v99 = vunpack.c.l.b16 %v54
    %v100 = vunpack.c.l.b16 %v55
    %v101 = vunpack.c.l.b16 %v56
    %v102 = vunpack.c.l.b16 %v57
    %v103 = vpack.c.b16 %v88, %v87
    %v104 = vpack.c.b16 %v90, %v89
    %v105 = vpack.c.b16 %v92, %v91
    %v106 = vpack.c.b16 %v94, %v93
    %v107 = vpack.c.b16 %v96, %v95
    %v108 = vpack.c.b16 %v98, %v97
    %v109 = vpack.c.b16 %v100, %v99
    %v110 = vpack.c.b16 %v102, %v101
    %v112 = vunpack.c.l.b16 %v58
    %v113 = vunpack.c.h.b16 %v58
    %v114 = vpack.c.b16 %v112, %v112
    %v115 = vpack.c.b16 %v113, %v113
    %vm116 = vcmask 64512
    %v118 = vsel %vm116, %v103, 0
    %v121 = vsel %vm116, %v104, 0
    %v124 = vsel %vm116, %v105, 0
    %v127 = vsel %vm116, %v106, 0
    %v130 = vsel %vm116, %v107, 0
    %v133 = vsel %vm116, %v108, 0
    %v136 = vsel %vm116, %v109, 0
    %v139 = vsel %vm116, %v110, 0
    %vm141 = vcmask 1043456
    %v143 = vsel %vm141, %v114, 0
    %v146 = vsel %vm141, %v115, 0
    %148 = vmatprep.subr.bf16.mxu0 %v146
    %149 = vmatpush1.bf16.msra.mxu0 %v143
    %150 = vmatprep.subr.bf16.mxu0 0
    %151 = vmatpush1.bf16.msra.mxu0 0
    %152 = vmatprep.subr.bf16.mxu0 0
    %153 = vmatpush1.bf16.msra.mxu0 0
    %154 = vmatprep.subr.bf16.mxu0 0
    %155 = vmatpush1.bf16.msra.mxu0 0
    %156 = vmatprep.subr.bf16.mxu0 0
    %157 = vmatpush1.bf16.msra.mxu0 0
    %158 = vmatprep.subr.bf16.mxu0 0
    %159 = vmatpush1.bf16.msra.mxu0 0
    %160 = vmatprep.subr.bf16.mxu0 0
    %161 = vmatpush1.bf16.msra.mxu0 0
    %162 = vmatprep.subr.bf16.mxu0 0
    %163 = vmatpush1.bf16.msra.mxu0 0
    %164 = vmatprep.subr.bf16.mxu0 0
    %165 = vmatpush1.bf16.msra.mxu0 0
    %166 = vmatprep.subr.bf16.mxu0 0
    %167 = vmatpush1.bf16.msra.mxu0 0
    %168 = vmatprep.subr.bf16.mxu0 0
    %169 = vmatpush1.bf16.msra.mxu0 0
    %170 = vmatprep.subr.bf16.mxu0 0
    %171 = vmatpush1.bf16.msra.mxu0 0
    %172 = vmatprep.subr.bf16.mxu0 0
    %173 = vmatpush1.bf16.msra.mxu0 0
    %174 = vmatprep.subr.bf16.mxu0 0
    %175 = vmatpush1.bf16.msra.mxu0 0
    %176 = vmatprep.subr.bf16.mxu0 0
    %177 = vmatpush1.bf16.msra.mxu0 0
    %178 = vmatprep.subr.bf16.mxu0 0
    %179 = vmatpush1.bf16.msra.mxu0 0
    %180 = vmatprep.mubr.bf16.mxu0 0
    %181 = vmatmul.mubr.bf16.gmra.mrb[0].mxu0 %v118
    %v182 = vpop.f32.mrb[0].mxu0
    %v183 = vadd.f32 %v64, %v182
    %v184 = vpop.f32.mrb[0].mxu0
    %v185 = vadd.f32 %v68, %v184
    %v186 = vpop.f32.mrb[0].mxu0
    %v187 = vadd.f32 %v64, %v186
    %v188 = vpop.f32.mrb[0].mxu0
    %v189 = vadd.f32 %v68, %v188
    %190 = vmatprep.mubr.bf16.mxu0 0
    %191 = vmatmul.mubr.bf16.gmra.mrb[0].mxu0 %v121
    %v192 = vpop.f32.mrb[0].mxu0
    %v193 = vadd.f32 %v64, %v192
    %v194 = vpop.f32.mrb[0].mxu0
    %v195 = vadd.f32 %v68, %v194
    %v196 = vpop.f32.mrb[0].mxu0
    %v197 = vadd.f32 %v64, %v196
    %v198 = vpop.f32.mrb[0].mxu0
    %v199 = vadd.f32 %v68, %v198
    %200 = vmatprep.mubr.bf16.mxu0 0
    %201 = vmatmul.mubr.bf16.gmra.mrb[0].mxu0 %v124
    %v202 = vpop.f32.mrb[0].mxu0
    %v203 = vadd.f32 %v64, %v202
    %v204 = vpop.f32.mrb[0].mxu0
    %v205 = vadd.f32 %v68, %v204
    %v206 = vpop.f32.mrb[0].mxu0
    %v207 = vadd.f32 %v64, %v206
    %v208 = vpop.f32.mrb[0].mxu0
    %v209 = vadd.f32 %v68, %v208
    %210 = vmatprep.mubr.bf16.mxu0 0
    %211 = vmatmul.mubr.bf16.gmra.mrb[0].mxu0 %v127
    %v212 = vpop.f32.mrb[0].mxu0
    %v213 = vadd.f32 %v64, %v212
    %v214 = vpop.f32.mrb[0].mxu0
    %v215 = vadd.f32 %v68, %v214
    %v216 = vpop.f32.mrb[0].mxu0
    %v217 = vadd.f32 %v64, %v216
    %v218 = vpop.f32.mrb[0].mxu0
    %v219 = vadd.f32 %v68, %v218
    %220 = vmatprep.mubr.bf16.mxu0 0
    %221 = vmatmul.mubr.bf16.gmra.mrb[0].mxu0 %v130
    %v222 = vpop.f32.mrb[0].mxu0
    %v223 = vadd.f32 %v64, %v222
    %v224 = vpop.f32.mrb[0].mxu0
    %v225 = vadd.f32 %v68, %v224
    %v226 = vpop.f32.mrb[0].mxu0
    %v227 = vadd.f32 %v64, %v226
    %v228 = vpop.f32.mrb[0].mxu0
    %v229 = vadd.f32 %v68, %v228
    %230 = vmatprep.mubr.bf16.mxu0 0
    %231 = vmatmul.mubr.bf16.gmra.mrb[0].mxu0 %v133
    %v232 = vpop.f32.mrb[0].mxu0
    %v233 = vadd.f32 %v64, %v232
    %v234 = vpop.f32.mrb[0].mxu0
    %v235 = vadd.f32 %v68, %v234
    %v236 = vpop.f32.mrb[0].mxu0
    %v237 = vadd.f32 %v64, %v236
    %v238 = vpop.f32.mrb[0].mxu0
    %v239 = vadd.f32 %v68, %v238
    %240 = vmatprep.mubr.bf16.mxu0 0
    %241 = vmatmul.mubr.bf16.gmra.mrb[0].mxu0 %v136
    %v242 = vpop.f32.mrb[0].mxu0
    %v243 = vadd.f32 %v64, %v242
    %v244 = vpop.f32.mrb[0].mxu0
    %v245 = vadd.f32 %v68, %v244
    %v246 = vpop.f32.mrb[0].mxu0
    %v247 = vadd.f32 %v64, %v246
    %v248 = vpop.f32.mrb[0].mxu0
    %v249 = vadd.f32 %v68, %v248
    %250 = vmatprep.mubr.bf16.mxu0 0
    %251 = vmatmul.mubr.bf16.gmra.mrb[0].mxu0 %v139
    %v252 = vpop.f32.mrb[0].mxu0
    %v253 = vadd.f32 %v64, %v252
    %v254 = vpop.f32.mrb[0].mxu0
    %v255 = vadd.f32 %v68, %v254
    %v256 = vpop.f32.mrb[0].mxu0
    %v257 = vadd.f32 %v64, %v256
    %v258 = vpop.f32.mrb[0].mxu0
    %v259 = vadd.f32 %v68, %v258
    %260 = vdwg.mxu0
    %v261 = vmax.f32 %v183, 0.0
    %v262 = vmax.f32 %v185, 0.0
    %v263 = vmax.f32 %v187, 0.0
    %v264 = vmax.f32 %v189, 0.0
    %v265 = vmax.f32 %v193, 0.0
    %v266 = vmax.f32 %v195, 0.0
    %v267 = vmax.f32 %v197, 0.0
    %v268 = vmax.f32 %v199, 0.0
    %v269 = vmax.f32 %v203, 0.0
    %v270 = vmax.f32 %v205, 0.0
    %v271 = vmax.f32 %v207, 0.0
    %v272 = vmax.f32 %v209, 0.0
    %v273 = vmax.f32 %v213, 0.0
    %v274 = vmax.f32 %v215, 0.0
    %v275 = vmax.f32 %v217, 0.0
    %v276 = vmax.f32 %v219, 0.0
    %v277 = vmax.f32 %v223, 0.0
    %v278 = vmax.f32 %v225, 0.0
    %v279 = vmax.f32 %v227, 0.0
    %v280 = vmax.f32 %v229, 0.0
    %v281 = vmax.f32 %v233, 0.0
    %v282 = vmax.f32 %v235, 0.0
    %v283 = vmax.f32 %v237, 0.0
    %v284 = vmax.f32 %v239, 0.0
    %v285 = vmax.f32 %v243, 0.0
    %v286 = vmax.f32 %v245, 0.0
    %v287 = vmax.f32 %v247, 0.0
    %v288 = vmax.f32 %v249, 0.0
    %v289 = vmax.f32 %v253, 0.0
    %v290 = vmax.f32 %v255, 0.0
    %v291 = vmax.f32 %v257, 0.0
    %v292 = vmax.f32 %v259, 0.0
    %v293 = vpack.c.bf16 %v263, %v261
    %v294 = vpack.c.bf16 %v264, %v262
    %v295 = vpack.c.bf16 %v267, %v265
    %v296 = vpack.c.bf16 %v268, %v266
    %v297 = vpack.c.bf16 %v271, %v269
    %v298 = vpack.c.bf16 %v272, %v270
    %v299 = vpack.c.bf16 %v275, %v273
    %v300 = vpack.c.bf16 %v276, %v274
    %v301 = vpack.c.bf16 %v279, %v277
    %v302 = vpack.c.bf16 %v280, %v278
    %v303 = vpack.c.bf16 %v283, %v281
    %v304 = vpack.c.bf16 %v284, %v282
    %v305 = vpack.c.bf16 %v287, %v285
    %v306 = vpack.c.bf16 %v288, %v286
    %v307 = vpack.c.bf16 %v291, %v289
    %v308 = vpack.c.bf16 %v292, %v290
    %v309 = vld [vmem:[#allocation2] sm:$0xff]
    %v310 = vld [vmem:[#allocation2 + $0x8] sm:$0xff]
    %v311 = vld [vmem:[#allocation2 + $0x10] sm:$0xff]
    %v312 = vld [vmem:[#allocation2 + $0x18] sm:$0xff]
    %v313 = vld [vmem:[#allocation2 + $0x20] sm:$0xff]
    %v314 = vld [vmem:[#allocation2 + $0x28] sm:$0xff]
    %v315 = vld [vmem:[#allocation2 + $0x30] sm:$0xff]
    %v316 = vld [vmem:[#allocation2 + $0x38] sm:$0xff]
    %v317 = vld [vmem:[#allocation2 + $0x40] sm:$0xff]
    %v318 = vld [vmem:[#allocation2 + $0x48] sm:$0xff]
    %v319 = vld [vmem:[#allocation2 + $0x50] sm:$0xff]
    %v320 = vld [vmem:[#allocation2 + $0x58] sm:$0xff]
    %v321 = vld [vmem:[#allocation2 + $0x60] sm:$0xff]
    %v322 = vld [vmem:[#allocation2 + $0x68] sm:$0xff]
    %v323 = vld [vmem:[#allocation2 + $0x70] sm:$0xff]
    %v324 = vld [vmem:[#allocation2 + $0x78] sm:$0xff]
    %v325 = vld [vmem:[#allocation2 + $0x80] sm:$0xff]
    %v326 = vld [vmem:[#allocation2 + $0x88] sm:$0xff]
    %v327 = vld [vmem:[#allocation2 + $0x90] sm:$0xff]
    %v328 = vld [vmem:[#allocation2 + $0x98] sm:$0xff]
    %v329 = vld [vmem:[#allocation2 + $0xa0] sm:$0xff]
    %v330 = vld [vmem:[#allocation2 + $0xa8] sm:$0xff]
    %v331 = vld [vmem:[#allocation2 + $0xb0] sm:$0xff]
    %v332 = vld [vmem:[#allocation2 + $0xb8] sm:$0xff]
    %v333 = vld [vmem:[#allocation2 + $0xc0] sm:$0xff]
    %v334 = vld [vmem:[#allocation2 + $0xc8] sm:$0xff]
    %v335 = vld [vmem:[#allocation2 + $0xd0] sm:$0xff]
    %v336 = vld [vmem:[#allocation2 + $0xd8] sm:$0xff]
    %v337 = vld [vmem:[#allocation2 + $0xe0] sm:$0xff]
    %v338 = vld [vmem:[#allocation2 + $0xe8] sm:$0xff]
    %v339 = vld [vmem:[#allocation2 + $0xf0] sm:$0xff]
    %v340 = vld [vmem:[#allocation2 + $0xf8] sm:$0xff]
    %v341 = vld [vmem:[%s4] sm:$0x3]
    %v343 = vlaneseq
    %v344 = vshrl.u32 %v343, 7
    %v345 = vsub.s32 0, %v344
    %v346 = vrot.slane %v341, %v345
    %v347 = vlaneseq
    %v348 = vshrl.u32 %v347, 7
    %v349 = vsub.s32 1, %v348
    %v350 = vrot.slane %v341, %v349
    %v385 = vunpack.c.l.b16 %v309
    %v386 = vunpack.c.h.b16 %v309
    %v387 = vunpack.c.l.b16 %v310
    %v388 = vunpack.c.h.b16 %v310
    %v389 = vunpack.c.l.b16 %v311
    %v390 = vunpack.c.h.b16 %v311
    %v391 = vunpack.c.l.b16 %v312
    %v392 = vunpack.c.h.b16 %v312
    %v393 = vunpack.c.l.b16 %v313
    %v394 = vunpack.c.h.b16 %v313
    %v395 = vunpack.c.l.b16 %v314
    %v396 = vunpack.c.h.b16 %v314
    %v397 = vunpack.c.l.b16 %v315
    %v398 = vunpack.c.h.b16 %v315
    %v399 = vunpack.c.l.b16 %v316
    %v400 = vunpack.c.h.b16 %v316
    %v401 = vunpack.c.l.b16 %v317
    %v402 = vunpack.c.h.b16 %v317
    %v403 = vunpack.c.l.b16 %v318
    %v404 = vunpack.c.h.b16 %v318
    %v405 = vunpack.c.l.b16 %v319
    %v406 = vunpack.c.h.b16 %v319
    %v407 = vunpack.c.l.b16 %v320
    %v408 = vunpack.c.h.b16 %v320
    %v409 = vunpack.c.l.b16 %v321
    %v410 = vunpack.c.h.b16 %v321
    %v411 = vunpack.c.l.b16 %v322
    %v412 = vunpack.c.h.b16 %v322
    %v413 = vunpack.c.l.b16 %v323
    %v414 = vunpack.c.h.b16 %v323
    %v415 = vunpack.c.l.b16 %v324
    %v416 = vunpack.c.h.b16 %v324
    %v417 = vunpack.c.l.b16 %v325
    %v418 = vunpack.c.h.b16 %v325
    %v419 = vunpack.c.l.b16 %v326
    %v420 = vunpack.c.h.b16 %v326
    %v421 = vunpack.c.l.b16 %v327
    %v422 = vunpack.c.h.b16 %v327
    %v423 = vunpack.c.l.b16 %v328
    %v424 = vunpack.c.h.b16 %v328
    %v425 = vunpack.c.l.b16 %v329
    %v426 = vunpack.c.h.b16 %v329
    %v427 = vunpack.c.l.b16 %v330
    %v428 = vunpack.c.h.b16 %v330
    %v429 = vunpack.c.l.b16 %v331
    %v430 = vunpack.c.h.b16 %v331
    %v431 = vunpack.c.l.b16 %v332
    %v432 = vunpack.c.h.b16 %v332
    %v433 = vunpack.c.l.b16 %v333
    %v434 = vunpack.c.h.b16 %v333
    %v435 = vunpack.c.l.b16 %v334
    %v436 = vunpack.c.h.b16 %v334
    %v437 = vunpack.c.l.b16 %v335
    %v438 = vunpack.c.h.b16 %v335
    %v439 = vunpack.c.l.b16 %v336
    %v440 = vunpack.c.h.b16 %v336
    %v441 = vunpack.c.l.b16 %v337
    %v442 = vunpack.c.h.b16 %v337
    %v443 = vunpack.c.l.b16 %v338
    %v444 = vunpack.c.h.b16 %v338
    %v445 = vunpack.c.l.b16 %v339
    %v446 = vunpack.c.h.b16 %v339
    %v447 = vunpack.c.l.b16 %v340
    %v448 = vunpack.c.h.b16 %v340
    %v449 = vpack.c.b16 %v387, %v385
    %v450 = vpack.c.b16 %v388, %v386
    %v451 = vpack.c.b16 %v391, %v389
    %v452 = vpack.c.b16 %v392, %v390
    %v453 = vpack.c.b16 %v395, %v393
    %v454 = vpack.c.b16 %v396, %v394
    %v455 = vpack.c.b16 %v399, %v397
    %v456 = vpack.c.b16 %v400, %v398
    %v457 = vpack.c.b16 %v403, %v401
    %v458 = vpack.c.b16 %v404, %v402
    %v459 = vpack.c.b16 %v407, %v405
    %v460 = vpack.c.b16 %v408, %v406
    %v461 = vpack.c.b16 %v411, %v409
    %v462 = vpack.c.b16 %v412, %v410
    %v463 = vpack.c.b16 %v415, %v413
    %v464 = vpack.c.b16 %v416, %v414
    %v465 = vpack.c.b16 %v419, %v417
    %v466 = vpack.c.b16 %v420, %v418
    %v467 = vpack.c.b16 %v423, %v421
    %v468 = vpack.c.b16 %v424, %v422
    %v469 = vpack.c.b16 %v427, %v425
    %v470 = vpack.c.b16 %v428, %v426
    %v471 = vpack.c.b16 %v431, %v429
    %v472 = vpack.c.b16 %v432, %v430
    %v473 = vpack.c.b16 %v435, %v433
    %v474 = vpack.c.b16 %v436, %v434
    %v475 = vpack.c.b16 %v439, %v437
    %v476 = vpack.c.b16 %v440, %v438
    %v477 = vpack.c.b16 %v443, %v441
    %v478 = vpack.c.b16 %v444, %v442
    %v479 = vpack.c.b16 %v447, %v445
    %v480 = vpack.c.b16 %v448, %v446
    %513 = vmatprep.subr.bf16.mxu0 %v450
    %514 = vmatpush1.bf16.msra.mxu0 %v449
    %515 = vmatprep.subr.bf16.mxu0 %v452
    %516 = vmatpush1.bf16.msra.mxu0 %v451
    %517 = vmatprep.subr.bf16.mxu0 %v454
    %518 = vmatpush1.bf16.msra.mxu0 %v453
    %519 = vmatprep.subr.bf16.mxu0 %v456
    %520 = vmatpush1.bf16.msra.mxu0 %v455
    %521 = vmatprep.subr.bf16.mxu0 %v458
    %522 = vmatpush1.bf16.msra.mxu0 %v457
    %523 = vmatprep.subr.bf16.mxu0 %v460
    %524 = vmatpush1.bf16.msra.mxu0 %v459
    %525 = vmatprep.subr.bf16.mxu0 %v462
    %526 = vmatpush1.bf16.msra.mxu0 %v461
    %527 = vmatprep.subr.bf16.mxu0 %v464
    %528 = vmatpush1.bf16.msra.mxu0 %v463
    %529 = vmatprep.subr.bf16.mxu0 %v466
    %530 = vmatpush1.bf16.msra.mxu0 %v465
    %531 = vmatprep.subr.bf16.mxu0 %v468
    %532 = vmatpush1.bf16.msra.mxu0 %v467
    %533 = vmatprep.subr.bf16.mxu0 %v470
    %534 = vmatpush1.bf16.msra.mxu0 %v469
    %535 = vmatprep.subr.bf16.mxu0 %v472
    %536 = vmatpush1.bf16.msra.mxu0 %v471
    %537 = vmatprep.subr.bf16.mxu0 %v474
    %538 = vmatpush1.bf16.msra.mxu0 %v473
    %539 = vmatprep.subr.bf16.mxu0 %v476
    %540 = vmatpush1.bf16.msra.mxu0 %v475
    %541 = vmatprep.subr.bf16.mxu0 %v478
    %542 = vmatpush1.bf16.msra.mxu0 %v477
    %543 = vmatprep.subr.bf16.mxu0 %v480
    %544 = vmatpush1.bf16.msra.mxu0 %v479
    %545 = vmatprep.mubr.bf16.mxu0 %v294
    %546 = vmatmul.mubr.bf16.gmra.mrb[0].mxu0 %v293
    %v547 = vpop.f32.mrb[0].mxu0
    %v548 = vadd.f32 %v346, %v547
    %v549 = vpop.f32.mrb[0].mxu0
    %v550 = vadd.f32 %v350, %v549
    %v551 = vpop.f32.mrb[0].mxu0
    %v552 = vadd.f32 %v346, %v551
    %v553 = vpop.f32.mrb[0].mxu0
    %v554 = vadd.f32 %v350, %v553
    %555 = vmatprep.mubr.bf16.mxu0 %v296
    %556 = vmatmul.mubr.bf16.gmra.mrb[0].mxu0 %v295
    %v557 = vpop.f32.mrb[0].mxu0
    %v558 = vadd.f32 %v346, %v557
    %v559 = vpop.f32.mrb[0].mxu0
    %v560 = vadd.f32 %v350, %v559
    %v561 = vpop.f32.mrb[0].mxu0
    %v562 = vadd.f32 %v346, %v561
    %v563 = vpop.f32.mrb[0].mxu0
    %v564 = vadd.f32 %v350, %v563
    %565 = vmatprep.mubr.bf16.mxu0 %v298
    %566 = vmatmul.mubr.bf16.gmra.mrb[0].mxu0 %v297
    %v567 = vpop.f32.mrb[0].mxu0
    %v568 = vadd.f32 %v346, %v567
    %v569 = vpop.f32.mrb[0].mxu0
    %v570 = vadd.f32 %v350, %v569
    %v571 = vpop.f32.mrb[0].mxu0
    %v572 = vadd.f32 %v346, %v571
    %v573 = vpop.f32.mrb[0].mxu0
    %v574 = vadd.f32 %v350, %v573
    %575 = vmatprep.mubr.bf16.mxu0 %v300
    %576 = vmatmul.mubr.bf16.gmra.mrb[0].mxu0 %v299
    %v577 = vpop.f32.mrb[0].mxu0
    %v578 = vadd.f32 %v346, %v577
    %v579 = vpop.f32.mrb[0].mxu0
    %v580 = vadd.f32 %v350, %v579
    %v581 = vpop.f32.mrb[0].mxu0
    %v582 = vadd.f32 %v346, %v581
    %v583 = vpop.f32.mrb[0].mxu0
    %v584 = vadd.f32 %v350, %v583
    %585 = vmatprep.mubr.bf16.mxu0 %v302
    %586 = vmatmul.mubr.bf16.gmra.mrb[0].mxu0 %v301
    %v587 = vpop.f32.mrb[0].mxu0
    %v588 = vadd.f32 %v346, %v587
    %v589 = vpop.f32.mrb[0].mxu0
    %v590 = vadd.f32 %v350, %v589
    %v591 = vpop.f32.mrb[0].mxu0
    %v592 = vadd.f32 %v346, %v591
    %v593 = vpop.f32.mrb[0].mxu0
    %v594 = vadd.f32 %v350, %v593
    %595 = vmatprep.mubr.bf16.mxu0 %v304
    %596 = vmatmul.mubr.bf16.gmra.mrb[0].mxu0 %v303
    %v597 = vpop.f32.mrb[0].mxu0
    %v598 = vadd.f32 %v346, %v597
    %v599 = vpop.f32.mrb[0].mxu0
    %v600 = vadd.f32 %v350, %v599
    %v601 = vpop.f32.mrb[0].mxu0
    %v602 = vadd.f32 %v346, %v601
    %v603 = vpop.f32.mrb[0].mxu0
    %v604 = vadd.f32 %v350, %v603
    %605 = vmatprep.mubr.bf16.mxu0 %v306
    %606 = vmatmul.mubr.bf16.gmra.mrb[0].mxu0 %v305
    %v607 = vpop.f32.mrb[0].mxu0
    %v608 = vadd.f32 %v346, %v607
    %v609 = vpop.f32.mrb[0].mxu0
    %v610 = vadd.f32 %v350, %v609
    %v611 = vpop.f32.mrb[0].mxu0
    %v612 = vadd.f32 %v346, %v611
    %v613 = vpop.f32.mrb[0].mxu0
    %v614 = vadd.f32 %v350, %v613
    %615 = vmatprep.mubr.bf16.mxu0 %v308
    %616 = vmatmul.mubr.bf16.gmra.mrb[0].mxu0 %v307
    %v617 = vpop.f32.mrb[0].mxu0
    %v618 = vadd.f32 %v346, %v617
    %v619 = vpop.f32.mrb[0].mxu0
    %v620 = vadd.f32 %v350, %v619
    %v621 = vpop.f32.mrb[0].mxu0
    %v622 = vadd.f32 %v346, %v621
    %v623 = vpop.f32.mrb[0].mxu0
    %v624 = vadd.f32 %v350, %v623
    %625 = vdwg.mxu0
    %v626 = vmax.f32 %v548, 0.0
    %v627 = vmax.f32 %v550, 0.0
    %v628 = vmax.f32 %v552, 0.0
    %v629 = vmax.f32 %v554, 0.0
    %v630 = vmax.f32 %v558, 0.0
    %v631 = vmax.f32 %v560, 0.0
    %v632 = vmax.f32 %v562, 0.0
    %v633 = vmax.f32 %v564, 0.0
    %v634 = vmax.f32 %v568, 0.0
    %v635 = vmax.f32 %v570, 0.0
    %v636 = vmax.f32 %v572, 0.0
    %v637 = vmax.f32 %v574, 0.0
    %v638 = vmax.f32 %v578, 0.0
    %v639 = vmax.f32 %v580, 0.0
    %v640 = vmax.f32 %v582, 0.0
    %v641 = vmax.f32 %v584, 0.0
    %v642 = vmax.f32 %v588, 0.0
    %v643 = vmax.f32 %v590, 0.0
    %v644 = vmax.f32 %v592, 0.0
    %v645 = vmax.f32 %v594, 0.0
    %v646 = vmax.f32 %v598, 0.0
    %v647 = vmax.f32 %v600, 0.0
    %v648 = vmax.f32 %v602, 0.0
    %v649 = vmax.f32 %v604, 0.0
    %v650 = vmax.f32 %v608, 0.0
    %v651 = vmax.f32 %v610, 0.0
    %v652 = vmax.f32 %v612, 0.0
    %v653 = vmax.f32 %v614, 0.0
    %v654 = vmax.f32 %v618, 0.0
    %v655 = vmax.f32 %v620, 0.0
    %v656 = vmax.f32 %v622, 0.0
    %v657 = vmax.f32 %v624, 0.0
    %v658 = vld [vmem:[%s5] sm:$0xff]
    %v659 = vpack.c.bf16 %v628, %v626
    %v660 = vpack.c.bf16 %v629, %v627
    %v661 = vpack.c.bf16 %v632, %v630
    %v662 = vpack.c.bf16 %v633, %v631
    %v663 = vpack.c.bf16 %v636, %v634
    %v664 = vpack.c.bf16 %v637, %v635
    %v665 = vpack.c.bf16 %v640, %v638
    %v666 = vpack.c.bf16 %v641, %v639
    %v667 = vpack.c.bf16 %v644, %v642
    %v668 = vpack.c.bf16 %v645, %v643
    %v669 = vpack.c.bf16 %v648, %v646
    %v670 = vpack.c.bf16 %v649, %v647
    %v671 = vpack.c.bf16 %v652, %v650
    %v672 = vpack.c.bf16 %v653, %v651
    %v673 = vpack.c.bf16 %v656, %v654
    %v674 = vpack.c.bf16 %v657, %v655
    %v675 = vld [vmem:[%s6] sm:$0xff]
    %677 = vset.pattern.permute.xlu0 0
    %678 = vperm.xlu0 %677, %v675
    %v679 = vpop.permute.xlu0 %678
    %v682 = vunpack.c.l.b16 %v658
    %v683 = vunpack.c.h.b16 %v658
    %v684 = vpack.c.b16 %v682, %v682
    %v685 = vpack.c.b16 %v683, %v683
    %688 = vmatprep.subr.bf16.mxu0 %v660
    %689 = vmatpush1.bf16.xpose.msra.mxu0 %v659
    %690 = vmatprep.subr.bf16.mxu0 %v662
    %691 = vmatpush1.bf16.xpose.msra.mxu0 %v661
    %692 = vmatprep.subr.bf16.mxu0 %v664
    %693 = vmatpush1.bf16.xpose.msra.mxu0 %v663
    %694 = vmatprep.subr.bf16.mxu0 %v666
    %695 = vmatpush1.bf16.xpose.msra.mxu0 %v665
    %696 = vmatprep.subr.bf16.mxu0 %v668
    %697 = vmatpush1.bf16.xpose.msra.mxu0 %v667
    %698 = vmatprep.subr.bf16.mxu0 %v670
    %699 = vmatpush1.bf16.xpose.msra.mxu0 %v669
    %700 = vmatprep.subr.bf16.mxu0 %v672
    %701 = vmatpush1.bf16.xpose.msra.mxu0 %v671
    %702 = vmatprep.subr.bf16.mxu0 %v674
    %703 = vmatpush1.bf16.xpose.msra.mxu0 %v673
    %704 = vmatprep.subr.bf16.mxu0 0
    %705 = vmatpush1.bf16.xpose.msra.mxu0 0
    %706 = vmatprep.subr.bf16.mxu0 0
    %707 = vmatpush1.bf16.xpose.msra.mxu0 0
    %708 = vmatprep.subr.bf16.mxu0 0
    %709 = vmatpush1.bf16.xpose.msra.mxu0 0
    %710 = vmatprep.subr.bf16.mxu0 0
    %711 = vmatpush1.bf16.xpose.msra.mxu0 0
    %712 = vmatprep.subr.bf16.mxu0 0
    %713 = vmatpush1.bf16.xpose.msra.mxu0 0
    %714 = vmatprep.subr.bf16.mxu0 0
    %715 = vmatpush1.bf16.xpose.msra.mxu0 0
    %716 = vmatprep.subr.bf16.mxu0 0
    %717 = vmatpush1.bf16.xpose.msra.mxu0 0
    %718 = vmatprep.subr.bf16.mxu0 0
    %719 = vmatpush1.bf16.xpose.msra.mxu0 0
    %720 = vmatprep.mubr.bf16.mxu0 %v685
    %721 = vmatmul.mubr.bf16.gmra.mrb[0].mxu0 %v684
    %v722 = vpop.f32.mrb[0].mxu0
    %v723 = vadd.f32 %v679, %v722
    %v724 = vpop.f32.mrb[0].mxu0
    %v725 = vpop.f32.mrb[0].mxu0
    %v726 = vpop.f32.mrb[0].mxu0
    %727 = vdwg.mxu0
    %v728 = vtanh.pop %v723
    %v729 = vsub.f32 %v728, 0.9
    %730 = vst [vmem:[#allocation5] sm:$0xff] %v729
    // Predicated region
    $region34: #{tpu_custom_call.1} parent=1 // pred_check
      _
    $region35: #{tpu_custom_call.1} parent=1 // pred_check_branch
      %732 = sbr.rel (0) target = $region37
    $region36: #{tpu_custom_call.1} parent=1 // pred_region
      %s734 = ssub.s32 128, 128
      %735 = vsyncadd [#allocation4], %s734
      %s737 = sshll.u32 [#allocation5], 4
      %s738 = int_to_ptr.vmem [resolvable:$true] %s737
      %740 = dma.vmem_to_hbm [thread:$0]  %s738, 128, %s7, [#allocation4]
    $region37: #{tpu_custom_call.1} parent=1 // pred_fallthru
      _
    // Predicated region
    $region38: #{tpu_custom_call.1} parent=1 // pred_check
      _
    $region39: #{tpu_custom_call.1} parent=1 // pred_check_branch
      %742 = sbr.rel (0) target = $region41
    $region40: #{tpu_custom_call.1} parent=1 // pred_region
      %743 = dma.done [#allocation4], 128
    $region41: #{tpu_custom_call.1} parent=1 // pred_fallthru
      _
    %744 = vsyncpa [#allocation3], 1
    %745 = vsyncpa [#allocation4], 1

</llo_original>
